<compile_context>
chip_gen: v6e
topology: v6e:2x2x1
jax: 0.10.0
libtpu: 0.0.40
codegen_flags: <defaults>
</compile_context>

<pallas_src>
import functools

import jax
import jax.numpy as jnp
from jax.experimental import pallas as pl
from jax.experimental.pallas import tpu as pltpu


# ----------------------------- sizing helpers ---------------------------------


def _round_up(x, m):
    return -(-x // m) * m


def _vmem_limit_bytes():
    """Generation-aware scoped-VMEM limit (~55% of per-core physical VMEM)."""
    cap = 64 << 20  # conservative default = v7x physical VMEM per TensorCore
    try:
        cap = int(pltpu.get_tpu_info().vmem_capacity_bytes)
    except Exception:
        pass
    # ~35 MiB on v7x (64 MiB phys), ~70 MiB on v5e/v6e (128 MiB phys).
    return int(min(max(cap * 0.55, 24 << 20), 72 << 20))


def _pick_tile_rows(n, per_row_bytes, vmem_limit, cap=32768):
    """Rows per tile: multiple of 8, lane-dense (full last axis), sized so the
    double-buffered streams + f32 temps stay inside ~80% of the VMEM limit."""
    budget = int(vmem_limit * 0.8)
    rows = (budget // max(1, per_row_bytes)) // 8 * 8
    rows = int(max(8, min(rows, cap)))
    # a single full-batch tile is allowed when it already fits (full-extent
    # block is exempt from the /8 rule)
    return n if n <= rows else rows


def _sanitize_tile_rows(tile_rows, n):
    t = int(tile_rows)
    if t >= n:
        return n
    return max(8, (t // 8) * 8)


# ----------------------------- kernels -----------------------------------------


def _mixup_ce_kernel(tile_n, tiles_per_core, n_rows, needs_mask,
                     lam_ref, y_pred_ref, tgt_ref, out_ref, acc_ref):
    """Accumulates sum_i [ lam*CE(x_i,t1_i) + (1-lam)*CE(x_i,t2_i) ] over this
    core's batch tiles; writes the per-core partial sum on its last step."""
    i = pl.program_id(1)

    @pl.when(i == 0)
    def _():
        acc_ref[0, 0] = jnp.float32(0.0)

    logits = y_pred_ref[...].astype(jnp.float32)                 # (tile_n, C)
    tn, c = logits.shape

    if needs_mask:
        # global tile index (unclamped) -> mask rows of padded / OOB tiles
        g = pl.program_id(0) * tiles_per_core + i
        row = jax.lax.broadcasted_iota(jnp.int32, (tn, 1), 0) + g * tile_n
        valid = row < n_rows                                     # (tile_n, 1)
        logits = jnp.where(valid, logits, 0.0)                   # keep exp finite

    # row-wise stable logsumexp
    m = jnp.max(logits, axis=-1, keepdims=True)
    lse = m + jnp.log(jnp.sum(jnp.exp(logits - m), axis=-1, keepdims=True))

    # fused picked-logit reduction with the weight built first (one full-tile mul):
    #   lam*(lse - x[t1]) + (1-lam)*(lse - x[t2]) = lse - sum_c w_c * x_c
    col = jax.lax.broadcasted_iota(jnp.int32, (tn, c), 1)        # (tile_n, C)
    lam = lam_ref[0, 0]
    t1 = tgt_ref[:, 0:1]                                         # (tile_n, 1) int32
    t2 = tgt_ref[:, 1:2]
    w = jnp.where(col == t1, lam, 0.0) + jnp.where(col == t2, 1.0 - lam, 0.0)
    picked = jnp.sum(w * logits, axis=-1, keepdims=True)         # (tile_n, 1)

    loss = lse - picked
    if needs_mask:
        loss = jnp.where(valid, loss, 0.0)
    acc_ref[0, 0] += jnp.sum(loss)

    @pl.when(i == pl.num_programs(1) - 1)
    def _():
        out_ref[...] = jnp.full((1, 8, 128), acc_ref[0, 0], jnp.float32)


def _bce_logits_kernel(tile_n, tiles_per_core, n_rows, needs_mask,
                       y_pred_ref, y_true_ref, out_ref, acc_ref):
    """binary_cross_entropy_with_logits sum, batch-tiled, per-core partial."""
    i = pl.program_id(1)

    @pl.when(i == 0)
    def _():
        acc_ref[0, 0] = jnp.float32(0.0)

    x = y_pred_ref[...].astype(jnp.float32)
    y = y_true_ref[...].astype(jnp.float32)

    # stable: max(x,0) - x*y + log1p(exp(-|x|))
    loss = jnp.maximum(x, 0.0) - x * y + jnp.log1p(jnp.exp(-jnp.abs(x)))

    if needs_mask:
        tn = x.shape[0]
        g = pl.program_id(0) * tiles_per_core + i
        row = jax.lax.broadcasted_iota(jnp.int32, (tn, 1), 0) + g * tile_n
        # select discards any NaN/Inf produced from padded-row garbage
        loss = jnp.where(row < n_rows, loss, 0.0)
    acc_ref[0, 0] += jnp.sum(loss)

    @pl.when(i == pl.num_programs(1) - 1)
    def _():
        out_ref[...] = jnp.full((1, 8, 128), acc_ref[0, 0], jnp.float32)


# ----------------------------- wrappers -----------------------------------------


def _core_split(num_tiles):
    """Leading 'parallel' grid axis of size 2 (used by v7x's 2 TensorCores;
    runs sequentially and nearly free on 1-TC chips)."""
    ncores = 2 if num_tiles >= 2 else 1
    tiles_per_core = pl.cdiv(num_tiles, ncores)
    return ncores, tiles_per_core


def _mixup_ce_loss(y_pred, y_true1, y_true2, lam, tile_rows=None):
    n, c = y_pred.shape
    itemsize = jnp.dtype(y_pred.dtype).itemsize
    vmem_limit = _vmem_limit_bytes()

    c_pad = _round_up(c, 128)
    # per-row VMEM bytes: native-dtype logits DMA tile (x2 buffers)
    #   + ~3 f32-sized compute temps (upcast / weights / exp)
    #   + packed int32 target tile lane-padded to 128 (x2 buffers)
    per_row = c_pad * itemsize * 2 + c_pad * 4 * 3 + 128 * 4 * 2
    if tile_rows is not None:
        tile_n = _sanitize_tile_rows(tile_rows, n)
    else:
        tile_n = _pick_tile_rows(n, per_row, vmem_limit)
    num_tiles = pl.cdiv(n, tile_n)
    ncores, tiles_per_core = _core_split(num_tiles)
    needs_mask = (n % tile_n != 0) or (num_tiles % ncores != 0)

    lam_arr = jnp.asarray(lam, jnp.float32).reshape(1, 1)
    # pack both target vectors into one (N, 2) int32 input -> one DMA stream
    tgt = jnp.stack(
        [jnp.asarray(y_true1, jnp.int32).reshape(n),
         jnp.asarray(y_true2, jnp.int32).reshape(n)],
        axis=-1,
    )

    def tile_idx(p, i):
        # clamp so fully-OOB tiles (odd tile counts) re-read a valid tile; the
        # in-kernel row mask zeroes their contribution.
        return jnp.minimum(p * tiles_per_core + i, num_tiles - 1)

    kernel = functools.partial(_mixup_ce_kernel, tile_n, tiles_per_core, n,
                               needs_mask)
    out = pl.pallas_call(
        kernel,
        out_shape=jax.ShapeDtypeStruct((ncores, 8, 128), jnp.float32),
        grid=(ncores, tiles_per_core),
        in_specs=[
            pl.BlockSpec((1, 1), lambda p, i: (0, 0),
                         memory_space=pltpu.MemorySpace.SMEM),            # lam
            pl.BlockSpec((tile_n, c), lambda p, i: (tile_idx(p, i), 0)),  # logits
            pl.BlockSpec((tile_n, 2), lambda p, i: (tile_idx(p, i), 0)),  # targets
        ],
        out_specs=pl.BlockSpec((1, 8, 128), lambda p, i: (p, 0, 0)),      # partials
        scratch_shapes=[pltpu.SMEM((1, 1), jnp.float32)],
        compiler_params=pltpu.CompilerParams(
            dimension_semantics=("parallel", "arbitrary"),
            vmem_limit_bytes=vmem_limit,
        ),
    )(lam_arr, y_pred, tgt)
    return jnp.sum(out[:, 0, 0]) * jnp.float32(1.0 / n)


def _densify_for_bce(y_pred, y_true):
    """Reshape (N, C) to a lane-dense (M, L) layout (L a multiple of 128) when
    possible; the loss is elementwise + global mean, so this is free."""
    n, c = y_pred.shape
    if c % 128 == 0:
        return y_pred, y_true, n, c
    total = n * c
    if total % 128 == 0:
        for l in (4096, 2048, 1024, 512, 256, 128):
            if total % l == 0:
                m = total // l
                return y_pred.reshape(m, l), y_true.reshape(m, l), m, l
    # fall back to the original (lane-padded but correct) layout
    return y_pred, y_true, n, c


def _bce_with_logits_loss(y_pred, y_true, tile_rows=None):
    n_orig, c_orig = y_pred.shape
    xp, yt, m, l = _densify_for_bce(y_pred, y_true)
    vmem_limit = _vmem_limit_bytes()

    l_pad = _round_up(l, 128)
    isz = jnp.dtype(xp.dtype).itemsize + jnp.dtype(yt.dtype).itemsize
    per_row = l_pad * isz * 2 + l_pad * 4 * 3   # 2 streams x2 buffers + f32 temps
    if tile_rows is not None:
        tile_m = _sanitize_tile_rows(tile_rows, m)
    else:
        tile_m = _pick_tile_rows(m, per_row, vmem_limit)
    num_tiles = pl.cdiv(m, tile_m)
    ncores, tiles_per_core = _core_split(num_tiles)
    needs_mask = (m % tile_m != 0) or (num_tiles % ncores != 0)

    def tile_idx(p, i):
        return jnp.minimum(p * tiles_per_core + i, num_tiles - 1)

    kernel = functools.partial(_bce_logits_kernel, tile_m, tiles_per_core, m,
                               needs_mask)
    out = pl.pallas_call(
        kernel,
        out_shape=jax.ShapeDtypeStruct((ncores, 8, 128), jnp.float32),
        grid=(ncores, tiles_per_core),
        in_specs=[
            pl.BlockSpec((tile_m, l), lambda p, i: (tile_idx(p, i), 0)),  # logits
            pl.BlockSpec((tile_m, l), lambda p, i: (tile_idx(p, i), 0)),  # targets
        ],
        out_specs=pl.BlockSpec((1, 8, 128), lambda p, i: (p, 0, 0)),
        scratch_shapes=[pltpu.SMEM((1, 1), jnp.float32)],
        compiler_params=pltpu.CompilerParams(
            dimension_semantics=("parallel", "arbitrary"),
            vmem_limit_bytes=vmem_limit,
        ),
    )(xp, yt)
    return jnp.sum(out[:, 0, 0]) * jnp.float32(1.0 / (n_orig * c_orig))


def mixup_bce_loss(y_pred, y_true, tile_rows=None):
    """Forward pass of MixupBCELoss. `y_true` is either a dict (mixup CE path)
    or a float tensor of the same shape as y_pred (BCE-with-logits path)."""
    if isinstance(y_true, dict):
        return _mixup_ce_loss(
            y_pred, y_true["y_true1"], y_true["y_true2"], y_true["lam"],
            tile_rows=tile_rows)
    return _bce_with_logits_loss(y_pred, y_true, tile_rows=tile_rows)


# ----------------------------- reference (pure JAX) -----------------------------


def _ref_mixup(y_pred, t1, t2, lam):
    logp = jax.nn.log_softmax(y_pred.astype(jnp.float32), axis=-1)
    l1 = -jnp.take_along_axis(logp, t1[:, None].astype(jnp.int32), axis=-1)[:, 0]
    l2 = -jnp.take_along_axis(logp, t2[:, None].astype(jnp.int32), axis=-1)[:, 0]
    return jnp.mean(lam * l1 + (1.0 - lam) * l2)


def _ref_bce(y_pred, y_true):
    x = y_pred.astype(jnp.float32)
    y = y_true.astype(jnp.float32)
    loss = jnp.maximum(x, 0.0) - x * y + jnp.log1p(jnp.exp(-jnp.abs(x)))
    return jnp.mean(loss)


# ----------------------------- main ----------------------------------------------


if __name__ == "__main__":
    key = jax.random.PRNGKey(0)
    k1, k2, k3, k4, k5, k6, k7 = jax.random.split(key, 7)

    # ---- small shapes (single-tile, single-core path) ----
    N, C = 8, 32
    y_pred = jax.random.normal(k1, (N, C), dtype=jnp.float32)

    y_true1 = jax.random.randint(k2, (N,), 0, C, dtype=jnp.int32)
    y_true2 = jax.random.randint(k3, (N,), 0, C, dtype=jnp.int32)
    lam = jnp.float32(0.3)
    mix_dict = {"y_true1": y_true1, "y_true2": y_true2, "lam": lam}

    out_mix = mixup_bce_loss(y_pred, mix_dict)
    jax.block_until_ready(out_mix)
    ref_mix = _ref_mixup(y_pred, y_true1, y_true2, lam)
    assert jnp.allclose(out_mix, ref_mix, rtol=1e-5, atol=1e-5), (out_mix, ref_mix)

    y_true_soft = jax.random.uniform(k4, (N, C), dtype=jnp.float32)
    out_bce = mixup_bce_loss(y_pred, y_true_soft)
    jax.block_until_ready(out_bce)
    ref_bce = _ref_bce(y_pred, y_true_soft)
    assert jnp.allclose(out_bce, ref_bce, rtol=1e-5, atol=1e-5), (out_bce, ref_bce)

    # ---- multi-tile path: masked remainder tile + 2-way core split ----
    N2, C2 = 200, 160
    y_pred2 = jax.random.normal(k5, (N2, C2), dtype=jnp.float32)
    t1b = jax.random.randint(k6, (N2,), 0, C2, dtype=jnp.int32)
    t2b = jax.random.randint(k7, (N2,), 0, C2, dtype=jnp.int32)
    mix2 = {"y_true1": t1b, "y_true2": t2b, "lam": jnp.float32(0.7)}

    out_mix2 = mixup_bce_loss(y_pred2, mix2, tile_rows=64)
    jax.block_until_ready(out_mix2)
    ref_mix2 = _ref_mixup(y_pred2, t1b, t2b, jnp.float32(0.7))
    assert jnp.allclose(out_mix2, ref_mix2, rtol=1e-5, atol=1e-5), (out_mix2, ref_mix2)

    y_soft2 = jax.random.uniform(k5, (N2, C2), dtype=jnp.float32)
    out_bce2 = mixup_bce_loss(y_pred2, y_soft2, tile_rows=64)
    jax.block_until_ready(out_bce2)
    ref_bce2 = _ref_bce(y_pred2, y_soft2)
    assert jnp.allclose(out_bce2, ref_bce2, rtol=1e-5, atol=1e-5), (out_bce2, ref_bce2)

    print("KERNEL_OK")
</pallas_src>

<mosaic_0001>
module attributes {stable_mosaic.version = 11 : i64} {
  func.func @_mixup_ce_kernel(%arg0: i32, %arg1: i32, %arg2: memref<1x1xf32, #tpu.memory_space<smem>>, %arg3: memref<8x32xf32, #tpu.memory_space<vmem>>, %arg4: memref<8x2xi32, #tpu.memory_space<vmem>>, %arg5: memref<1x8x128xf32, #tpu.memory_space<vmem>>, %arg6: memref<1x1xf32, #tpu.memory_space<smem>>) attributes {dimension_semantics = [#tpu.dimension_semantics<parallel>, #tpu.dimension_semantics<arbitrary>], iteration_bounds = array<i64: 1, 1>, scalar_prefetch = 0 : i64, scratch_operands = 1 : i64, tpu.core_type = #tpu.core_type<tc>, window_params = [{transform_indices = @transform_0, window_bounds = array<i64: 1, 1>}, {transform_indices = @transform_1, window_bounds = array<i64: 8, 32>}, {transform_indices = @transform_2, window_bounds = array<i64: 8, 2>}, {transform_indices = @transform_3, window_bounds = array<i64: 1, 8, 128>}]} {
    %c0_i32 = arith.constant 0 : i32
    %0 = arith.cmpi eq, %arg1, %c0_i32 : i32
    %1 = arith.extui %0 : i1 to i32
    %c0_i32_0 = arith.constant 0 : i32
    %2 = arith.cmpi ne, %1, %c0_i32_0 : i32
    scf.if %2 {
      %cst_19 = arith.constant 0.000000e+00 : f32
      %c0_20 = arith.constant 0 : index
      %c0_21 = arith.constant 0 : index
      %43 = memref.load %arg6[%c0_20, %c0_21] : memref<1x1xf32, #tpu.memory_space<smem>>
      memref.store %cst_19, %arg6[%c0_20, %c0_21] : memref<1x1xf32, #tpu.memory_space<smem>>
    } else {
    }
    %c0 = arith.constant 0 : index
    %c0_1 = arith.constant 0 : index
    %3 = vector.load %arg3[%c0, %c0_1] : memref<8x32xf32, #tpu.memory_space<vmem>>, vector<8x32xf32>
    %cst = arith.constant dense<0xFF800000> : vector<8xf32>
    %4 = vector.multi_reduction <maximumf>, %3, %cst [1] : vector<8x32xf32> to vector<8xf32>
    %5 = vector.shape_cast %4 : vector<8xf32> to vector<8x1xf32>
    %6 = vector.broadcast %5 : vector<8x1xf32> to vector<8x32xf32>
    %7 = arith.subf %3, %6 : vector<8x32xf32>
    %8 = math.exp %7 : vector<8x32xf32>
    %cst_2 = arith.constant dense<0.000000e+00> : vector<8xf32>
    %9 = vector.multi_reduction <add>, %8, %cst_2 [1] : vector<8x32xf32> to vector<8xf32>
    %10 = vector.shape_cast %9 : vector<8xf32> to vector<8x1xf32>
    %11 = math.log %10 : vector<8x1xf32>
    %12 = arith.addf %5, %11 : vector<8x1xf32>
    %13 = tpu.iota {dimensions = array<i32: 1>} : vector<8x32xi32>
    %c0_3 = arith.constant 0 : index
    %c0_4 = arith.constant 0 : index
    %14 = memref.load %arg2[%c0_3, %c0_4] : memref<1x1xf32, #tpu.memory_space<smem>>
    %c0_5 = arith.constant 0 : index
    %c0_6 = arith.constant 0 : index
    %15 = vector.load %arg4[%c0_5, %c0_6] : memref<8x2xi32, #tpu.memory_space<vmem>>, vector<8x1xi32>
    %c0_7 = arith.constant 0 : index
    %c1 = arith.constant 1 : index
    %16 = vector.load %arg4[%c0_7, %c1] : memref<8x2xi32, #tpu.memory_space<vmem>>, vector<8x1xi32>
    %17 = vector.broadcast %15 : vector<8x1xi32> to vector<8x32xi32>
    %18 = arith.cmpi eq, %13, %17 : vector<8x32xi32>
    %cst_8 = arith.constant 0.000000e+00 : f32
    %19 = vector.broadcast %14 : f32 to vector<8x32xf32>
    %20 = vector.broadcast %cst_8 : f32 to vector<8x32xf32>
    %21 = arith.select %18, %19, %20 : vector<8x32xi1>, vector<8x32xf32>
    %22 = vector.broadcast %16 : vector<8x1xi32> to vector<8x32xi32>
    %23 = arith.cmpi eq, %13, %22 : vector<8x32xi32>
    %cst_9 = arith.constant 1.000000e+00 : f32
    %24 = arith.subf %cst_9, %14 : f32
    %cst_10 = arith.constant 0.000000e+00 : f32
    %25 = vector.broadcast %24 : f32 to vector<8x32xf32>
    %26 = vector.broadcast %cst_10 : f32 to vector<8x32xf32>
    %27 = arith.select %23, %25, %26 : vector<8x32xi1>, vector<8x32xf32>
    %28 = arith.addf %21, %27 : vector<8x32xf32>
    %29 = arith.mulf %28, %3 : vector<8x32xf32>
    %cst_11 = arith.constant dense<0.000000e+00> : vector<8xf32>
    %30 = vector.multi_reduction <add>, %29, %cst_11 [1] : vector<8x32xf32> to vector<8xf32>
    %31 = vector.shape_cast %30 : vector<8xf32> to vector<8x1xf32>
    %32 = arith.subf %12, %31 : vector<8x1xf32>
    %c0_12 = arith.constant 0 : index
    %c0_13 = arith.constant 0 : index
    %33 = memref.load %arg6[%c0_12, %c0_13] : memref<1x1xf32, #tpu.memory_space<smem>>
    %34 = vector.shape_cast %32 : vector<8x1xf32> to vector<1x8x1xf32>
    %cst_14 = arith.constant dense<0.000000e+00> : vector<1xf32>
    %35 = vector.multi_reduction <add>, %34, %cst_14 [1, 2] : vector<1x8x1xf32> to vector<1xf32>
    %36 = vector.shape_cast %35 : vector<1xf32> to vector<1x1x1xf32>
    %37 = vector.extract %36[0, 0, 0] : f32 from vector<1x1x1xf32>
    %38 = arith.addf %33, %37 : f32
    %c0_15 = arith.constant 0 : index
    %c0_16 = arith.constant 0 : index
    %39 = memref.load %arg6[%c0_15, %c0_16] : memref<1x1xf32, #tpu.memory_space<smem>>
    memref.store %38, %arg6[%c0_15, %c0_16] : memref<1x1xf32, #tpu.memory_space<smem>>
    %c0_i32_17 = arith.constant 0 : i32
    %40 = arith.cmpi eq, %arg1, %c0_i32_17 : i32
    %41 = arith.extui %40 : i1 to i32
    %c0_i32_18 = arith.constant 0 : i32
    %42 = arith.cmpi ne, %41, %c0_i32_18 : i32
    scf.if %42 {
      %c0_19 = arith.constant 0 : index
      %c0_20 = arith.constant 0 : index
      %43 = memref.load %arg6[%c0_19, %c0_20] : memref<1x1xf32, #tpu.memory_space<smem>>
      %44 = vector.broadcast %43 : f32 to vector<1x8x128xf32>
      %c0_21 = arith.constant 0 : index
      %c0_22 = arith.constant 0 : index
      %c0_23 = arith.constant 0 : index
      %45 = vector.load %arg5[%c0_21, %c0_22, %c0_23] : memref<1x8x128xf32, #tpu.memory_space<vmem>>, vector<1x8x128xf32>
      tpu.vector_store %arg5[%c0_21, %c0_22, %c0_23], %44 {strides = array<i32>} : memref<1x8x128xf32, #tpu.memory_space<vmem>>, vector<1x8x128xf32>,
    } else {
    }
    return
  }
  func.func @transform_0(%arg0: i32, %arg1: i32) -> (i32, i32) {
    %c0_i32 = arith.constant 0 : i32
    %c0_i32_0 = arith.constant 0 : i32
    %c0_i32_1 = arith.constant 0 : i32
    return %c0_i32, %c0_i32_0 : i32, i32
  }
  func.func @transform_1(%arg0: i32, %arg1: i32) -> (i32, i32) {
    %c1_i32 = arith.constant 1 : i32
    %0 = arith.muli %arg0, %c1_i32 : i32
    %1 = arith.addi %0, %arg1 : i32
    %c0_i32 = arith.constant 0 : i32
    %2 = arith.minsi %1, %c0_i32 : i32
    %c0_i32_0 = arith.constant 0 : i32
    %c0_i32_1 = arith.constant 0 : i32
    return %2, %c0_i32_0 : i32, i32
  }
  func.func @transform_2(%arg0: i32, %arg1: i32) -> (i32, i32) {
    %c1_i32 = arith.constant 1 : i32
    %0 = arith.muli %arg0, %c1_i32 : i32
    %1 = arith.addi %0, %arg1 : i32
    %c0_i32 = arith.constant 0 : i32
    %2 = arith.minsi %1, %c0_i32 : i32
    %c0_i32_0 = arith.constant 0 : i32
    %c0_i32_1 = arith.constant 0 : i32
    return %2, %c0_i32_0 : i32, i32
  }
  func.func @transform_3(%arg0: i32, %arg1: i32) -> (i32, i32, i32) {
    %c0_i32 = arith.constant 0 : i32
    %c0_i32_0 = arith.constant 0 : i32
    %c0_i32_1 = arith.constant 0 : i32
    return %arg0, %c0_i32, %c0_i32_0 : i32, i32, i32
  }
}

</mosaic_0001>

<llo_original>
// kernel: tpu_custom_call.1
$region0: #{tpu_custom_call.1}
  #allocation0 [shape = 'u32[]', space=smem, size = 0x4, offset = 0x4, fixed_abs, tag = 'smem constant byte address 0x4 - core index']
  #allocation1 [shape = 'u32[144,128]{1,0:T(1,128)}', space=vmem, size = 0x12000, scoped, tag = 'internal scratch']
  #allocation2 [shape = 'f32[1,1]{1,0:T(1,128)}', space=smem, size = 0x200, scoped, tag = 'scratch operand']
  #allocation3 [shape = 'f32[1,1]{1,0:T(1,128)S(6)}', space=smem, size = 0x200, scoped, tag = 'scoped memory for tpu_custom_call.1']
  %s0 = inlined_call_operand.<no memory space> [shape: f32[1,1], index: 0, kind: input, shape index: {}]
  %s1 = inlined_call_operand.vmem [shape: f32[8,32], index: 1, kind: input, shape index: {}]
  %s2 = inlined_call_operand.vmem [shape: s32[8,2], index: 2, kind: input, shape index: {}]
  %s3 = inlined_call_operand.hbm [shape: f32[1,8,128], index: 3, kind: output, shape index: {}]
  %s4 = sld [smem:[#allocation0]]
  $region30: #{tpu_custom_call.1} parent=0
    _
  %s6 = ssub.s32 1, %s4
  %s7 = scalar_select 0, %s6, %s4
  %8 = sst [smem:[#allocation3]] %s0
  $region1: #{tpu_custom_call.1} parent=0
    #allocation4 [shape = 'u8[4096]{0}', space=vmem, size = 0x1000, scoped, tag = 'output window, operand 0, single buffered']
    #allocation5 [shape = 's32[1]{0}', space=sflag, size = 0x4, scoped, tag = 'scoped memory for tpu_custom_call.1']
    %9 = vsyncpa [#allocation5], 0
    // Predicated region
    $region2: #{tpu_custom_call.1} parent=1 // pred_check
      _
    $region3: #{tpu_custom_call.1} parent=1 // pred_check_branch
      %11 = sbr.rel (0) target = $region5
    $region4: #{tpu_custom_call.1} parent=1 // pred_region
      _
    $region5: #{tpu_custom_call.1} parent=1 // pred_fallthru
      _
    // Predicated region
    $region6: #{tpu_custom_call.1} parent=1 // pred_check
      _
    $region7: #{tpu_custom_call.1} parent=1 // pred_check_branch
      %13 = sbr.rel (0) target = $region9
    $region8: #{tpu_custom_call.1} parent=1 // pred_region
      %s14 = sadd.s32 0, 0
      %p15 = scmp.lt.s32.totalorder %s14, 0
      %s16 = scalar_select %p15, %s14, 0
      %p17 = scmp.lt.s32.totalorder %s16, 0
      %s18 = scalar_select %p17, %s16, 0
      %s19 = smul.addr %s18, 8
      %s20 = scalar_lea.vmem %s1, %s19
      %s21 = sadd.s32 0, 0
      %p22 = scmp.lt.s32.totalorder %s21, 0
      %s23 = scalar_select %p22, %s21, 0
    $region9: #{tpu_custom_call.1} parent=1 // pred_fallthru
      _
    // Predicated region
    $region10: #{tpu_custom_call.1} parent=1 // pred_check
      _
    $region11: #{tpu_custom_call.1} parent=1 // pred_check_branch
      %25 = sbr.rel (0) target = $region13
    $region12: #{tpu_custom_call.1} parent=1 // pred_region
      %s26 = sadd.s32 0, 0
      %p27 = scmp.lt.s32.totalorder %s26, 0
      %s28 = scalar_select %p27, %s26, 0
      %p29 = scmp.lt.s32.totalorder %s28, 0
      %s30 = scalar_select %p29, %s28, 0
      %s31 = smul.addr %s30, 8
      %s32 = scalar_lea.vmem %s2, %s31
      %s33 = sadd.s32 0, 0
      %p34 = scmp.lt.s32.totalorder %s33, 0
      %s35 = scalar_select %p34, %s33, 0
    $region13: #{tpu_custom_call.1} parent=1 // pred_fallthru
      _
    %s36 = sadd.s32 0, 0
    %p37 = scmp.lt.s32.totalorder %s36, 0
    %s38 = scalar_select %p37, %s36, 0
    %p39 = scmp.lt.s32.totalorder %s38, 0
    %s40 = scalar_select %p39, %s38, 0
    %s41 = smul.addr %s40, 8
    %s42 = scalar_lea.vmem %s1, %s41
    %s43 = sadd.s32 0, 0
    %p44 = scmp.lt.s32.totalorder %s43, 0
    %s45 = scalar_select %p44, %s43, 0
    %p46 = scmp.lt.s32.totalorder %s45, 0
    %s47 = scalar_select %p46, %s45, 0
    %s48 = smul.addr %s47, 8
    %s49 = scalar_lea.vmem %s2, %s48
    %s50 = sadd.s32 0, 0
    %p51 = scmp.lt.s32.totalorder %s50, 0
    %s52 = scalar_select %p51, %s50, 0
    %p53 = scmp.lt.s32.totalorder %s52, 0
    %s54 = scalar_select %p53, %s52, 0
    %s55 = smul.addr %s54, 8
    %s56 = scalar_lea.vmem %s1, %s55
    %s57 = sadd.s32 0, 0
    %p58 = scmp.lt.s32.totalorder %s57, 0
    %s59 = scalar_select %p58, %s57, 0
    %s60 = sadd.s32 0, 0
    %p61 = scmp.lt.s32.totalorder %s60, 0
    %s62 = scalar_select %p61, %s60, 0
    %p63 = scmp.lt.s32.totalorder %s62, 0
    %s64 = scalar_select %p63, %s62, 0
    %s65 = smul.addr %s64, 8
    %s66 = scalar_lea.vmem %s2, %s65
    %s67 = sadd.s32 0, 0
    %p68 = scmp.lt.s32.totalorder %s67, 0
    %s69 = scalar_select %p68, %s67, 0
    %p70 = scmp.eq.s32.totalorder 0, 0
    // Predicated region
    $region14: #{tpu_custom_call.1} parent=1 // pred_check
      %p71 = pneg %p70
    $region15: #{tpu_custom_call.1} parent=1 // pred_check_branch
      %73 = sbr.rel (%p71) target = $region17
    $region16: #{tpu_custom_call.1} parent=1 // pred_region
      %s74 = scalar_lea.smem [#allocation2], 0
      %75 = sst [smem:[%s74]] 0.0
    $region17: #{tpu_custom_call.1} parent=1 // pred_fallthru
      _
    %v76 = vld [vmem:[%s56] sm:$0xff]
    %vm77 = vcmask 261120
    %v78 = vsel %vm77, %v76, -inf
    %79 = vmax.xlane.f32.xlu0 %v78
    %v80 = vpop.xlane.xlu0 %79
    %v81 = vsub.f32 %v76, %v80
    %v82 = vmul.f32 %v81, 1.442695
    %v83 = vpow.pop %v82
    %v84 = vsel %vm77, %v83, 0.0
    %85 = vadd.xlane.f32.xlu0 %v84
    %v86 = vpop.xlane.xlu0 %85
    %v87 = vlog2.pop %v86
    %v88 = vmul.f32 %v87, 0.6931472
    %v89 = vadd.f32 %v80, %v88
    %v90 = vlaneseq
    %v91 = vand.u32 %v90, 127
    %s92 = sld [smem:[#allocation3]]
    %v93 = vld [vmem:[%s66] sm:$0xff]
    %94 = vset.pattern.permute.xlu0 0
    %95 = vperm.xlu0 %94, %v93
    %v96 = vpop.permute.xlu0 %95
    %vm97 = vcmp.eq.s32.totalorder %v91, %v96
    %v98 = vstv %s92
    %v99 = vsel %vm97, %v98, 0.0
    %100 = vset.pattern.permute.xlu0 1
    %101 = vperm.xlu0 %100, %v93
    %v102 = vpop.permute.xlu0 %101
    %vm103 = vcmp.eq.s32.totalorder %v91, %v102
    %s104 = ssub.f32 1.0, %s92
    %v105 = vstv %s104
    %v106 = vsel %vm103, %v105, 0.0
    %v107 = vadd.f32 %v99, %v106
    %v108 = vmul.f32 %v107, %v76
    %v109 = vsel %vm77, %v108, 0.0
    %110 = vadd.xlane.f32.xlu0 %v109
    %v111 = vpop.xlane.xlu0 %110
    %v112 = vsub.f32 %v89, %v111
    %s113 = sld [smem:[#allocation2]]
    %vm114 = vcmask 7168
    %v115 = vsel %vm114, %v112, 0.0
    %116 = vadd.xlane.f32.xlu0 %v115
    %v117 = vpop.xlane.xlu0 %116
    %v118 = vrot.slane %v117, 4
    %v119 = vadd.f32 %v117, %v118
    %v120 = vrot.slane %v119, 2
    %v121 = vadd.f32 %v119, %v120
    %v122 = vrot.slane %v121, 1
    %v123 = vadd.f32 %v121, %v122
    %s124 = vtos %v123
    %s125 = sadd.f32 %s113, %s124
    %s126 = scalar_lea.smem [#allocation2], 0
    %127 = sst [smem:[%s126]] %s125
    // Predicated region
    $region18: #{tpu_custom_call.1} parent=1 // pred_check
      %p128 = pneg %p70
    $region19: #{tpu_custom_call.1} parent=1 // pred_check_branch
      %130 = sbr.rel (%p128) target = $region21
    $region20: #{tpu_custom_call.1} parent=1 // pred_region
      %s131 = sld [smem:[#allocation2]]
      %v132 = vstv %s131
      %133 = vst [vmem:[#allocation4] sm:$0xff] %v132
    $region21: #{tpu_custom_call.1} parent=1 // pred_fallthru
      _
    // Predicated region
    $region22: #{tpu_custom_call.1} parent=1 // pred_check
      _
    $region23: #{tpu_custom_call.1} parent=1 // pred_check_branch
      %135 = sbr.rel (0) target = $region25
    $region24: #{tpu_custom_call.1} parent=1 // pred_region
      %s137 = ssub.s32 128, 128
      %138 = vsyncadd [#allocation5], %s137
      %s140 = sshll.u32 [#allocation4], 4
      %s141 = int_to_ptr.vmem [resolvable:$true] %s140
      %143 = dma.vmem_to_hbm [thread:$0]  %s141, 128, %s3, [#allocation5]
    $region25: #{tpu_custom_call.1} parent=1 // pred_fallthru
      _
    // Predicated region
    $region26: #{tpu_custom_call.1} parent=1 // pred_check
      _
    $region27: #{tpu_custom_call.1} parent=1 // pred_check_branch
      %145 = sbr.rel (0) target = $region29
    $region28: #{tpu_custom_call.1} parent=1 // pred_region
      %146 = dma.done [#allocation5], 128
    $region29: #{tpu_custom_call.1} parent=1 // pred_fallthru
      _
    %147 = vsyncpa [#allocation5], 1

</llo_original>
